<compile_context>
chip_gen: v7x
topology: tpu7x:2x2x1
jax: 0.10.0
libtpu: 0.0.40
codegen_flags: <defaults>
</compile_context>

<pallas_src>
import functools

import jax
import jax.numpy as jnp
from jax.experimental import pallas as pl
from jax.experimental.pallas import tpu as pltpu

_MB = 1024 * 1024
NEG_INF = -1e30  # mask constant kept in f32 (scores are f32)


# ----------------------------------------------------------------------------
# Generation-aware config
# ----------------------------------------------------------------------------

def _hw_config():
    """Tiling + VMEM budget per TPU generation (v5e/v6e: 128 MiB, v7x: 64 MiB)."""
    cap = None
    try:
        cap = getattr(pltpu.get_tpu_info(), "vmem_capacity_bytes", None)
    except Exception:
        cap = None
    if cap is None:
        cap = 64 * _MB                               # conservative default
    if cap >= 120 * _MB:                             # v5e / v6e (128 MiB VMEM)
        return dict(vmem_limit=96 * _MB,
                    qkv_tm=256, qkv_tn=512,
                    wo_tm=512, wo_tn=512, wo_tk=1024,
                    ffn_tm=256, ffn_th=1024,
                    head_tm=256, head_tn=512,
                    attn_tile=512)
    return dict(vmem_limit=40 * _MB,                 # v7x (64 MiB physical VMEM)
                qkv_tm=256, qkv_tn=256,
                wo_tm=256, wo_tn=256, wo_tk=512,
                ffn_tm=256, ffn_th=256,
                head_tm=256, head_tn=256,
                attn_tile=512)


CFG = _hw_config()


def _cparams(*sem):
    return pltpu.CompilerParams(dimension_semantics=sem,
                                vmem_limit_bytes=CFG["vmem_limit"])


def _round_up(x, m):
    return (x + m - 1) // m * m


def _fit_tile(full, target, align):
    """Pick a tile <= target for a dim of size `full`.

    Returns (tile, padded_size).  Prefers an `align`-aligned divisor of `full`
    (no padding); a dim smaller than `target` uses a full-size block (legal
    per Mosaic's "block == full array dim" exemption); otherwise the dim must
    be zero-padded up to `padded_size`."""
    if full <= target:
        return full, full
    t = (target // align) * align
    while t >= align:
        if full % t == 0:
            return t, full
        t -= align
    t = (target // align) * align
    return t, _round_up(full, t)


# ----------------------------------------------------------------------------
# Fused RMSNorm + matmul (QKV projection and final-norm + lm-head)
# ----------------------------------------------------------------------------

def _rmsnorm_matmul_kernel(x_ref, g_ref, w_ref, o_ref, xn_ref, *, eps):
    # Normalized rows computed once per row tile (j == 0) and cached in VMEM,
    # reused across every output-column tile.
    @pl.when(pl.program_id(1) == 0)
    def _():
        x = x_ref[...].astype(jnp.float32)
        ms = jnp.mean(x * x, axis=-1, keepdims=True)
        xn = x * jax.lax.rsqrt(ms + eps) * g_ref[...].astype(jnp.float32)
        xn_ref[...] = xn.astype(xn_ref.dtype)

    o_ref[...] = jnp.dot(xn_ref[...], w_ref[...],
                         preferred_element_type=jnp.float32).astype(o_ref.dtype)


def rmsnorm_linear(x, g, w, eps, *, out_dtype=jnp.bfloat16, tm, tn):
    """RMSNorm(x; g) @ w, tiled over (rows, out-cols); full D per block."""
    M, D = x.shape
    D2, N = w.shape
    assert D == D2
    tm, Mp = _fit_tile(M, tm, 8)
    tn, Np = _fit_tile(N, tn, 128)
    if Mp != M:
        x = jnp.pad(x, ((0, Mp - M), (0, 0)))
    if Np != N:
        # TODO(synk): pre-pad non-tile-aligned weights (e.g. odd vocab) once at
        # weight-prep time instead of per call.
        w = jnp.pad(w, ((0, 0), (0, Np - N)))

    out = pl.pallas_call(
        functools.partial(_rmsnorm_matmul_kernel, eps=eps),
        out_shape=jax.ShapeDtypeStruct((Mp, Np), out_dtype),
        grid=(Mp // tm, Np // tn),
        in_specs=[pl.BlockSpec((tm, D), lambda i, j: (i, 0)),
                  pl.BlockSpec((1, D), lambda i, j: (0, 0)),
                  pl.BlockSpec((D, tn), lambda i, j: (0, j))],
        out_specs=pl.BlockSpec((tm, tn), lambda i, j: (i, j)),
        scratch_shapes=[pltpu.VMEM((tm, D), jnp.bfloat16)],
        compiler_params=_cparams("parallel", "arbitrary"),
    )(x, g.reshape(1, D), w)
    if Mp != M or Np != N:
        out = out[:M, :N]
    return out


# ----------------------------------------------------------------------------
# Tiled matmul with fused residual add (wo projection)
# ----------------------------------------------------------------------------

def _matmul_res_kernel(x_ref, w_ref, r_ref, o_ref, acc_ref):
    @pl.when(pl.program_id(2) == 0)
    def _():
        acc_ref[...] = jnp.zeros(acc_ref.shape, dtype=acc_ref.dtype)

    acc_ref[...] += jnp.dot(x_ref[...], w_ref[...],
                            preferred_element_type=jnp.float32)

    @pl.when(pl.program_id(2) == pl.num_programs(2) - 1)
    def _():
        o_ref[...] = (acc_ref[...] +
                      r_ref[...].astype(jnp.float32)).astype(o_ref.dtype)


def linear_residual(x, w, res, *, out_dtype=jnp.bfloat16, tm, tn, tk):
    """(x @ w) + res with the residual add fused into the final K-step."""
    M, K = x.shape
    K2, N = w.shape
    assert K == K2 and res.shape == (M, N)
    tm, Mp = _fit_tile(M, tm, 8)
    tn, Np = _fit_tile(N, tn, 128)
    tk, Kp = _fit_tile(K, tk, 128)
    if Mp != M or Kp != K:
        x = jnp.pad(x, ((0, Mp - M), (0, Kp - K)))
    if Kp != K or Np != N:
        w = jnp.pad(w, ((0, Kp - K), (0, Np - N)))
    if Mp != M or Np != N:
        res = jnp.pad(res, ((0, Mp - M), (0, Np - N)))

    out = pl.pallas_call(
        _matmul_res_kernel,
        out_shape=jax.ShapeDtypeStruct((Mp, Np), out_dtype),
        grid=(Mp // tm, Np // tn, Kp // tk),
        in_specs=[pl.BlockSpec((tm, tk), lambda i, j, k: (i, k)),
                  pl.BlockSpec((tk, tn), lambda i, j, k: (k, j)),
                  pl.BlockSpec((tm, tn), lambda i, j, k: (i, j))],
        out_specs=pl.BlockSpec((tm, tn), lambda i, j, k: (i, j)),
        scratch_shapes=[pltpu.VMEM((tm, tn), jnp.float32)],
        compiler_params=_cparams("parallel", "parallel", "arbitrary"),
    )(x, w, res)
    if Mp != M or Np != N:
        out = out[:M, :N]
    return out


# ----------------------------------------------------------------------------
# Fused FFN: RMSNorm + SwiGLU + w2 + residual (hidden dim is the reduction axis)
# ----------------------------------------------------------------------------

def _ffn_kernel(x_ref, g_ref, w1_ref, w3_ref, w2_ref, r_ref, o_ref,
                xn_ref, acc_ref, *, eps):
    h = pl.program_id(1)

    @pl.when(h == 0)
    def _():
        x = x_ref[...].astype(jnp.float32)
        ms = jnp.mean(x * x, axis=-1, keepdims=True)
        xn = x * jax.lax.rsqrt(ms + eps) * g_ref[...].astype(jnp.float32)
        xn_ref[...] = xn.astype(xn_ref.dtype)
        acc_ref[...] = jnp.zeros(acc_ref.shape, dtype=acc_ref.dtype)

    xn = xn_ref[...]
    h1 = jnp.dot(xn, w1_ref[...], preferred_element_type=jnp.float32)
    h3 = jnp.dot(xn, w3_ref[...], preferred_element_type=jnp.float32)
    gated = (h1 * jax.nn.sigmoid(h1) * h3).astype(w2_ref.dtype)   # silu gate
    acc_ref[...] += jnp.dot(gated, w2_ref[...],
                            preferred_element_type=jnp.float32)

    @pl.when(h == pl.num_programs(1) - 1)
    def _():
        o_ref[...] = (acc_ref[...] +
                      r_ref[...].astype(jnp.float32)).astype(o_ref.dtype)


def ffn(x, g, w1, w2, w3, res, eps, *, out_dtype=jnp.bfloat16, tm, th):
    """res + w2(silu(w1(RMSNorm(x))) * w3(RMSNorm(x))); the [M, hidden] gated
    activation never touches HBM and the residual add is fused."""
    M, D = x.shape
    _, Hd = w1.shape
    tm, Mp = _fit_tile(M, tm, 8)
    th, Hp = _fit_tile(Hd, th, 128)
    if Mp != M:
        x = jnp.pad(x, ((0, Mp - M), (0, 0)))
        res = jnp.pad(res, ((0, Mp - M), (0, 0)))
    if Hp != Hd:
        w1 = jnp.pad(w1, ((0, 0), (0, Hp - Hd)))
        w3 = jnp.pad(w3, ((0, 0), (0, Hp - Hd)))
        w2 = jnp.pad(w2, ((0, Hp - Hd), (0, 0)))

    out = pl.pallas_call(
        functools.partial(_ffn_kernel, eps=eps),
        out_shape=jax.ShapeDtypeStruct((Mp, D), out_dtype),
        grid=(Mp // tm, Hp // th),
        in_specs=[pl.BlockSpec((tm, D), lambda i, h: (i, 0)),
                  pl.BlockSpec((1, D), lambda i, h: (0, 0)),
                  pl.BlockSpec((D, th), lambda i, h: (0, h)),
                  pl.BlockSpec((D, th), lambda i, h: (0, h)),
                  pl.BlockSpec((th, D), lambda i, h: (h, 0)),
                  pl.BlockSpec((tm, D), lambda i, h: (i, 0))],
        out_specs=pl.BlockSpec((tm, D), lambda i, h: (i, 0)),
        scratch_shapes=[pltpu.VMEM((tm, D), jnp.bfloat16),   # normalized x
                        pltpu.VMEM((tm, D), jnp.float32)],   # f32 accumulator
        compiler_params=_cparams("parallel", "arbitrary"),
    )(x, g.reshape(1, D), w1, w3, w2, res)
    if Mp != M:
        out = out[:M]
    return out


# ----------------------------------------------------------------------------
# Causal flash attention: GQA-group per grid step, fused RoPE, clamped KV DMA
# ----------------------------------------------------------------------------

def _rot_half(x):
    d = x.shape[-1]
    return jnp.concatenate([x[..., d // 2:], x[..., :d // 2]], axis=-1)


def _flash_kernel(q_ref, k_ref, v_ref, cq_ref, sq_ref, ck_ref, sk_ref,
                  o_ref, m_ref, l_ref, acc_ref, qr_ref, *, scale, t, rep, dh):
    qi = pl.program_id(2)
    ki = pl.program_id(3)

    @pl.when(ki == 0)
    def _():
        # Rotate Q once per (b, g, qi) and cache it; init softmax state.
        q = q_ref[0].astype(jnp.float32)                       # (rep, t, dh)
        cq = cq_ref[...].astype(jnp.float32)                   # (t, dh)
        sq = sq_ref[...].astype(jnp.float32)
        qr = q * cq[None] + _rot_half(q) * sq[None]
        qr_ref[...] = qr.reshape(rep * t, dh).astype(qr_ref.dtype)
        m_ref[...] = jnp.full(m_ref.shape, NEG_INF, dtype=m_ref.dtype)
        l_ref[...] = jnp.zeros(l_ref.shape, dtype=l_ref.dtype)
        acc_ref[...] = jnp.zeros(acc_ref.shape, dtype=acc_ref.dtype)

    q_start = qi * t
    kv_start = ki * t

    def process(apply_mask):
        k = k_ref[0, 0].astype(jnp.float32)                    # (t, dh)
        ck = ck_ref[...].astype(jnp.float32)
        sk = sk_ref[...].astype(jnp.float32)
        kr = (k * ck + _rot_half(k) * sk).astype(v_ref.dtype)  # rotated K, bf16
        qrt = qr_ref[...]                                      # (rep*t, dh)
        s = jax.lax.dot_general(qrt, kr, (((1,), (1,)), ((), ())),
                                preferred_element_type=jnp.float32) * scale
        if apply_mask:   # only the diagonal-straddling tile builds the mask
            row = q_start + jax.lax.broadcasted_iota(
                jnp.int32, (rep, t, t), 1).reshape(rep * t, t)
            col = kv_start + jax.lax.broadcasted_iota(
                jnp.int32, (rep * t, t), 1)
            s = jnp.where(col <= row, s, NEG_INF)
        m_prev = m_ref[...]
        m_new = jnp.maximum(m_prev, jnp.max(s, axis=-1, keepdims=True))
        alpha = jnp.exp(m_prev - m_new)
        p = jnp.exp(s - m_new)
        l_ref[...] = alpha * l_ref[...] + jnp.sum(p, axis=-1, keepdims=True)
        acc_ref[...] = alpha * acc_ref[...] + jnp.dot(
            p.astype(v_ref.dtype), v_ref[0, 0],
            preferred_element_type=jnp.float32)
        m_ref[...] = m_new

    # tq == tkv, so causal classification is simply ki vs qi:
    @pl.when(ki < qi)            # fully visible tile -> no mask math
    def _():
        process(False)

    @pl.when(ki == qi)           # diagonal tile -> masked path
    def _():
        process(True)

    # ki > qi: fully masked; no compute and (via clamped index_map) no DMA.

    @pl.when(ki == pl.num_programs(3) - 1)
    def _():
        inv_l = pl.reciprocal(l_ref[...], approx=True)
        o_ref[...] = (acc_ref[...] * inv_l).reshape(1, rep, t, dh
                                                    ).astype(o_ref.dtype)


def flash_attention(q, k, v, cos2, sin2, *, scale, tile):
    """q: [B, H, S, Dh]; k, v: [B, KVH, S, Dh]; cos2/sin2: [S, Dh] (rotate-half
    form).  One grid step handles a whole GQA group (rep = H // KVH heads)."""
    B, H, S, Dh = q.shape
    KVH = k.shape[1]
    rep = H // KVH

    if S <= tile:
        t, Sp = S, S
    else:
        t = (tile // 8) * 8
        while t >= 8 and S % t:
            t -= 8
        if t < 8 or S % t:
            t, Sp = tile, _round_up(S, tile)
        else:
            Sp = S
    if Sp != S:
        pad = Sp - S
        q = jnp.pad(q, ((0, 0), (0, 0), (0, pad), (0, 0)))
        k = jnp.pad(k, ((0, 0), (0, 0), (0, pad), (0, 0)))
        v = jnp.pad(v, ((0, 0), (0, 0), (0, pad), (0, 0)))
        cos2 = jnp.pad(cos2, ((0, pad), (0, 0)))
        sin2 = jnp.pad(sin2, ((0, pad), (0, 0)))

    q_spec = pl.BlockSpec((1, rep, t, Dh), lambda b, g, qi, ki: (b, g, qi, 0))
    # Clamp the KV block index so fully-masked tiles re-use the already-fetched
    # block (no new DMA).
    kv_spec = pl.BlockSpec((1, 1, t, Dh),
                           lambda b, g, qi, ki: (b, g, jnp.minimum(ki, qi), 0))
    cq_spec = pl.BlockSpec((t, Dh), lambda b, g, qi, ki: (qi, 0))
    ck_spec = pl.BlockSpec((t, Dh),
                           lambda b, g, qi, ki: (jnp.minimum(ki, qi), 0))

    out = pl.pallas_call(
        functools.partial(_flash_kernel, scale=scale, t=t, rep=rep, dh=Dh),
        out_shape=jax.ShapeDtypeStruct((B, H, Sp, Dh), q.dtype),
        grid=(B, KVH, Sp // t, Sp // t),
        in_specs=[q_spec, kv_spec, kv_spec, cq_spec, cq_spec, ck_spec, ck_spec],
        out_specs=pl.BlockSpec((1, rep, t, Dh),
                               lambda b, g, qi, ki: (b, g, qi, 0)),
        scratch_shapes=[pltpu.VMEM((rep * t, 1), jnp.float32),   # running max
                        pltpu.VMEM((rep * t, 1), jnp.float32),   # running denom
                        pltpu.VMEM((rep * t, Dh), jnp.float32),  # output acc
                        pltpu.VMEM((rep * t, Dh), q.dtype)],     # rotated Q
        compiler_params=_cparams("parallel", "parallel", "parallel",
                                 "arbitrary"),
    )(q, k, v, cos2, sin2, cos2, sin2)
    if Sp != S:
        out = out[:, :, :S]
    return out


# ----------------------------------------------------------------------------
# Plain-JAX glue (rotary tables, weight prep, embedding)
# ----------------------------------------------------------------------------

def precompute_freqs_cis(dim, end, theta):
    freqs = 1.0 / theta ** (jnp.arange(0, dim, 2)[: dim // 2].astype(jnp.float32) / dim)
    t = jnp.arange(end, dtype=jnp.float32)
    return jnp.outer(t, freqs)          # [end, dim//2]


def _deinterleave_heads(w, n_heads, head_dim):
    """Reorder a projection's output columns so each head's rotary pairs go
    from interleaved (x0,x1,x2,x3,...) to split halves ([evens][odds]); this
    makes RoPE a rotate-half (dot products / attention are unchanged)."""
    D = w.shape[0]
    w = w.reshape(D, n_heads, head_dim // 2, 2)
    w = jnp.concatenate([w[..., 0], w[..., 1]], axis=-1)
    return w.reshape(D, n_heads * head_dim)


# ----------------------------------------------------------------------------
# Model
# ----------------------------------------------------------------------------

class ModelArgs:
    def __init__(self, dim, n_layers, head_dim, hidden_dim, n_heads,
                 n_kv_heads, norm_eps, vocab_size, max_seq_len,
                 rope_theta=10000.0):
        self.dim = dim
        self.n_layers = n_layers
        self.head_dim = head_dim
        self.hidden_dim = hidden_dim
        self.n_heads = n_heads
        self.n_kv_heads = n_kv_heads
        self.norm_eps = norm_eps
        self.vocab_size = vocab_size
        self.max_seq_len = max_seq_len
        self.rope_theta = rope_theta


def init_params(args, key):
    """Weights stored bf16 as [in, out] (PyTorch nn.Linear(in, out) stores
    [out, in]; y = x @ W.T == x @ W_here)."""
    def nrm(k, shape, std=0.02):
        return (std * jax.random.normal(k, shape, dtype=jnp.float32)
                ).astype(jnp.bfloat16)

    keys = jax.random.split(key, 2 + 7 * args.n_layers)
    params = {
        "tok_embeddings": nrm(keys[0], (args.vocab_size, args.dim)),
        "output": nrm(keys[1], (args.dim, args.vocab_size)),
        "norm": jnp.ones((args.dim,), jnp.bfloat16),
        "layers": [],
    }
    hid = args.n_heads * args.head_dim
    kvd = args.n_kv_heads * args.head_dim
    for l in range(args.n_layers):
        k = keys[2 + 7 * l: 2 + 7 * (l + 1)]
        params["layers"].append({
            "wq": nrm(k[0], (args.dim, hid)),
            "wk": nrm(k[1], (args.dim, kvd)),
            "wv": nrm(k[2], (args.dim, kvd)),
            "wo": nrm(k[3], (hid, args.dim)),
            "w1": nrm(k[4], (args.dim, args.hidden_dim)),
            "w2": nrm(k[5], (args.hidden_dim, args.dim)),
            "w3": nrm(k[6], (args.dim, args.hidden_dim)),
            "attention_norm": jnp.ones((args.dim,), jnp.bfloat16),
            "ffn_norm": jnp.ones((args.dim,), jnp.bfloat16),
        })
    return params


def prepare_params(params, args):
    """One-time weight prep: de-interleave the rotary columns of wq/wk and
    fuse wq/wk/wv into a single wqkv for the fused RMSNorm+QKV kernel."""
    H, KVH, Dh = args.n_heads, args.n_kv_heads, args.head_dim
    new_layers = []
    for lp in params["layers"]:
        lp = dict(lp)
        wq = _deinterleave_heads(lp["wq"], H, Dh)
        wk = _deinterleave_heads(lp["wk"], KVH, Dh)
        lp["wqkv"] = jnp.concatenate([wq, wk, lp["wv"]], axis=1)
        new_layers.append(lp)
    out = dict(params)
    out["layers"] = new_layers
    return out


def attention_forward(lp, x, cos2, sin2, args):
    """Takes the unnormalized residual x; attention_norm is fused into the
    single QKV projection kernel, RoPE is fused into the flash kernel, and
    the `x +` residual is fused into the wo-projection epilogue."""
    B, S, D = x.shape
    H, KVH, Dh = args.n_heads, args.n_kv_heads, args.head_dim
    xf = x.reshape(B * S, D)

    qkv = rmsnorm_linear(xf, lp["attention_norm"], lp["wqkv"], args.norm_eps,
                         tm=CFG["qkv_tm"], tn=CFG["qkv_tn"])
    nq, nk = H * Dh, KVH * Dh
    # TODO(synk): the head-layout transposes around the flash kernel are still
    # XLA copies; fold them into the kernel BlockSpecs if they show up in traces.
    xq = qkv[:, :nq].reshape(B, S, H, Dh).transpose(0, 2, 1, 3)
    xk = qkv[:, nq:nq + nk].reshape(B, S, KVH, Dh).transpose(0, 2, 1, 3)
    xv = qkv[:, nq + nk:].reshape(B, S, KVH, Dh).transpose(0, 2, 1, 3)

    out = flash_attention(xq, xk, xv, cos2, sin2, scale=Dh ** (-0.5),
                          tile=CFG["attn_tile"])                # [B, H, S, Dh]
    out = out.transpose(0, 2, 1, 3).reshape(B * S, H * Dh)
    return linear_residual(out, lp["wo"], xf, tm=CFG["wo_tm"],
                           tn=CFG["wo_tn"], tk=CFG["wo_tk"]).reshape(B, S, D)


def transformer_block(lp, x, cos2, sin2, args):
    B, S, D = x.shape
    h = attention_forward(lp, x, cos2, sin2, args)          # == x + attn(norm(x))
    hf = h.reshape(B * S, D)
    out = ffn(hf, lp["ffn_norm"], lp["w1"], lp["w2"], lp["w3"], hf,
              args.norm_eps, tm=CFG["ffn_tm"], th=CFG["ffn_th"])
    return out.reshape(B, S, D)                              # == h + ffn(norm(h))


def transformer_forward(params, input_ids, args, start_pos=0):
    """Mirrors Transformer.forward (no incremental_state, model_parallel=1)."""
    B, S = input_ids.shape
    h = jnp.take(params["tok_embeddings"], input_ids, axis=0)   # [B, S, D] bf16

    freqs = precompute_freqs_cis(args.head_dim, args.max_seq_len,
                                 args.rope_theta)
    cos = jnp.cos(freqs[start_pos:start_pos + S])
    sin = jnp.sin(freqs[start_pos:start_pos + S])
    # Rotate-half form (matches the de-interleaved wq/wk column order).
    cos2 = jnp.concatenate([cos, cos], axis=-1).astype(h.dtype)   # [S, Dh]
    sin2 = jnp.concatenate([-sin, sin], axis=-1).astype(h.dtype)  # [S, Dh]

    for lp in params["layers"]:
        h = transformer_block(lp, h, cos2, sin2, args)

    # Final RMSNorm fused into the lm-head (normalized rows cached across the
    # vocab tiles); logits in f32 (matches `outs.float()`).
    logits = rmsnorm_linear(h.reshape(B * S, args.dim), params["norm"],
                            params["output"], args.norm_eps,
                            out_dtype=jnp.float32,
                            tm=CFG["head_tm"], tn=CFG["head_tn"])
    return logits.reshape(B, S, args.vocab_size)


# ----------------------------------------------------------------------------
# Entry point
# ----------------------------------------------------------------------------

if __name__ == "__main__":
    args = ModelArgs(dim=32, n_layers=2, head_dim=8, hidden_dim=64,
                     n_heads=4, n_kv_heads=2, norm_eps=1e-5,
                     vocab_size=64, max_seq_len=16, rope_theta=10000.0)

    key = jax.random.PRNGKey(0)
    pkey, ikey = jax.random.split(key)
    params = prepare_params(init_params(args, pkey), args)

    B, S = 2, 8
    input_ids = jax.random.randint(ikey, (B, S), 0, args.vocab_size,
                                   dtype=jnp.int32)

    logits = transformer_forward(params, input_ids, args, start_pos=0)
    logits = jax.block_until_ready(logits)
    assert logits.shape == (B, S, args.vocab_size)
    assert logits.dtype == jnp.float32
    assert bool(jnp.all(jnp.isfinite(logits)))
    print("KERNEL_OK")
</pallas_src>

<mosaic_0001>
module attributes {stable_mosaic.version = 11 : i64} {
  func.func @_rmsnorm_matmul_kernel(%arg0: i32, %arg1: i32, %arg2: memref<16x32xbf16, #tpu.memory_space<vmem>>, %arg3: memref<1x32xbf16, #tpu.memory_space<vmem>>, %arg4: memref<32x64xbf16, #tpu.memory_space<vmem>>, %arg5: memref<16x64xbf16, #tpu.memory_space<vmem>>, %arg6: memref<16x32xbf16, #tpu.memory_space<vmem>>) attributes {dimension_semantics = [#tpu.dimension_semantics<parallel>, #tpu.dimension_semantics<arbitrary>], iteration_bounds = array<i64: 1, 1>, scalar_prefetch = 0 : i64, scratch_operands = 1 : i64, tpu.core_type = #tpu.core_type<tc>, window_params = [{transform_indices = @transform_0, window_bounds = array<i64: 16, 32>}, {pipeline_mode = #tpu.pipeline_mode<synchronous>, transform_indices = @transform_1, window_bounds = array<i64: 1, 32>}, {transform_indices = @transform_2, window_bounds = array<i64: 32, 64>}, {transform_indices = @transform_3, window_bounds = array<i64: 16, 64>}]} {
    %c0_i32 = arith.constant 0 : i32
    %0 = arith.cmpi eq, %arg1, %c0_i32 : i32
    %1 = arith.extui %0 : i1 to i32
    %c0_i32_0 = arith.constant 0 : i32
    %2 = arith.cmpi ne, %1, %c0_i32_0 : i32
    scf.if %2 {
      %c0_6 = arith.constant 0 : index
      %c0_7 = arith.constant 0 : index
      %8 = vector.load %arg2[%c0_6, %c0_7] : memref<16x32xbf16, #tpu.memory_space<vmem>>, vector<16x32xbf16>
      %9 = arith.extf %8 : vector<16x32xbf16> to vector<16x32xf32>
      %10 = arith.mulf %9, %9 : vector<16x32xf32>
      %cst_8 = arith.constant dense<0.000000e+00> : vector<16xf32>
      %11 = vector.multi_reduction <add>, %10, %cst_8 [1] : vector<16x32xf32> to vector<16xf32>
      %12 = vector.shape_cast %11 : vector<16xf32> to vector<16x1xf32>
      %cst_9 = arith.constant 3.200000e+01 : f32
      %13 = vector.broadcast %cst_9 : f32 to vector<16x1xf32>
      %14 = arith.divf %12, %13 : vector<16x1xf32>
      %cst_10 = arith.constant 9.99999974E-6 : f32
      %15 = vector.broadcast %cst_10 : f32 to vector<16x1xf32>
      %16 = arith.addf %14, %15 : vector<16x1xf32>
      %17 = math.rsqrt %16 : vector<16x1xf32>
      %18 = vector.broadcast %17 : vector<16x1xf32> to vector<16x32xf32>
      %19 = arith.mulf %9, %18 : vector<16x32xf32>
      %c0_11 = arith.constant 0 : index
      %c0_12 = arith.constant 0 : index
      %20 = vector.load %arg3[%c0_11, %c0_12] : memref<1x32xbf16, #tpu.memory_space<vmem>>, vector<1x32xbf16>
      %21 = arith.extf %20 : vector<1x32xbf16> to vector<1x32xf32>
      %22 = vector.broadcast %21 : vector<1x32xf32> to vector<16x32xf32>
      %23 = arith.mulf %19, %22 : vector<16x32xf32>
      %24 = arith.truncf %23 : vector<16x32xf32> to vector<16x32xbf16>
      %c0_13 = arith.constant 0 : index
      %c0_14 = arith.constant 0 : index
      %25 = vector.load %arg6[%c0_13, %c0_14] : memref<16x32xbf16, #tpu.memory_space<vmem>>, vector<16x32xbf16>
      tpu.vector_store %arg6[%c0_13, %c0_14], %24 {strides = array<i32>} : memref<16x32xbf16, #tpu.memory_space<vmem>>, vector<16x32xbf16>,
    } else {
    }
    %c0 = arith.constant 0 : index
    %c0_1 = arith.constant 0 : index
    %3 = vector.load %arg6[%c0, %c0_1] : memref<16x32xbf16, #tpu.memory_space<vmem>>, vector<16x32xbf16>
    %c0_2 = arith.constant 0 : index
    %c0_3 = arith.constant 0 : index
    %4 = vector.load %arg4[%c0_2, %c0_3] : memref<32x64xbf16, #tpu.memory_space<vmem>>, vector<32x64xbf16>
    %cst = arith.constant dense<0.000000e+00> : vector<16x64xf32>
    %5 = tpu.matmul %3, %4, %cst {dimension_numbers = #tpu.dot_dimension_numbers<[1], [0], [0], [1], [0, 0, 1, 1], [], []>} : vector<16x32xbf16>, vector<32x64xbf16>, vector<16x64xf32> -> vector<16x64xf32>
    %6 = arith.truncf %5 : vector<16x64xf32> to vector<16x64xbf16>
    %c0_4 = arith.constant 0 : index
    %c0_5 = arith.constant 0 : index
    %7 = vector.load %arg5[%c0_4, %c0_5] : memref<16x64xbf16, #tpu.memory_space<vmem>>, vector<16x64xbf16>
    tpu.vector_store %arg5[%c0_4, %c0_5], %6 {strides = array<i32>} : memref<16x64xbf16, #tpu.memory_space<vmem>>, vector<16x64xbf16>,
    return
  }
  func.func @transform_0(%arg0: i32, %arg1: i32) -> (i32, i32) {
    %c0_i32 = arith.constant 0 : i32
    %c0_i32_0 = arith.constant 0 : i32
    return %arg0, %c0_i32 : i32, i32
  }
  func.func @transform_1(%arg0: i32, %arg1: i32) -> (i32, i32) {
    %c0_i32 = arith.constant 0 : i32
    %c0_i32_0 = arith.constant 0 : i32
    %c0_i32_1 = arith.constant 0 : i32
    return %c0_i32, %c0_i32_0 : i32, i32
  }
  func.func @transform_2(%arg0: i32, %arg1: i32) -> (i32, i32) {
    %c0_i32 = arith.constant 0 : i32
    %c0_i32_0 = arith.constant 0 : i32
    return %c0_i32, %arg1 : i32, i32
  }
  func.func @transform_3(%arg0: i32, %arg1: i32) -> (i32, i32) {
    %c0_i32 = arith.constant 0 : i32
    return %arg0, %arg1 : i32, i32
  }
}

</mosaic_0001>

<llo_original>
// kernel: tpu_custom_call.1
$region0: #{tpu_custom_call.1}
  #allocation0 [shape = 'u32[]', space=smem, size = 0x4, offset = 0x4, fixed_abs, tag = 'smem constant byte address 0x4 - core index']
  #allocation1 [shape = 'u32[144,128]{1,0:T(1,128)}', space=vmem, size = 0x12000, scoped, tag = 'internal scratch']
  #allocation2 [shape = 'bf16[16,32]{1,0:T(16,128)(2,1)}', space=vmem, size = 0x1000, scoped, tag = 'scratch operand']
  %s0 = inlined_call_operand.hbm [shape: bf16[16,32], index: 0, kind: input, shape index: {}]
  %s1 = inlined_call_operand.vmem [shape: bf16[1,32], index: 1, kind: input, shape index: {}]
  %s2 = inlined_call_operand.hbm [shape: bf16[32,64], index: 2, kind: input, shape index: {}]
  %s3 = inlined_call_operand.hbm [shape: bf16[16,64], index: 3, kind: output, shape index: {}]
  %s4 = sld [smem:[#allocation0]]
  $region34: #{tpu_custom_call.1} parent=0
    _
  %s6 = ssub.s32 1, %s4
  %s7 = scalar_select 0, %s6, %s4
  $region1: #{tpu_custom_call.1} parent=0
    #allocation3 [shape = 'u8[4096]{0}', space=vmem, size = 0x1000, scoped, tag = 'input window, operand 0, single buffered']
    #allocation4 [shape = 's32[1]{0}', space=sflag, size = 0x4, scoped, tag = 'scoped memory for tpu_custom_call.1']
    #allocation5 [shape = 's32[1]{0}', space=sflag, size = 0x4, scoped, tag = 'scoped memory for tpu_custom_call.1']
    #allocation6 [shape = 'u8[8192]{0}', space=vmem, size = 0x2000, scoped, tag = 'input window, operand 2, single buffered']
    #allocation7 [shape = 's32[1]{0}', space=sflag, size = 0x4, scoped, tag = 'scoped memory for tpu_custom_call.1']
    #allocation8 [shape = 'u8[4096]{0}', space=vmem, size = 0x1000, scoped, tag = 'output window, operand 0, single buffered']
    %8 = vsyncpa [#allocation4], 0
    %9 = vsyncpa [#allocation7], 0
    %10 = vsyncpa [#allocation5], 0
    // Predicated region
    $region2: #{tpu_custom_call.1} parent=1 // pred_check
      _
    $region3: #{tpu_custom_call.1} parent=1 // pred_check_branch
      %12 = sbr.rel (0) target = $region5
    $region4: #{tpu_custom_call.1} parent=1 // pred_region
      %s14 = ssub.s32 128, 128
      %15 = vsyncadd [#allocation4], %s14
      %s16 = sshll.u32 [#allocation3], 4
      %s17 = int_to_ptr.vmem [resolvable:$true] %s16
      %22 = dma.hbm_to_vmem [thread:$0]  %s0, 128, %s17, [#allocation4], 64, 64, 4
    $region5: #{tpu_custom_call.1} parent=1 // pred_fallthru
      _
    // Predicated region
    $region6: #{tpu_custom_call.1} parent=1 // pred_check
      _
    $region7: #{tpu_custom_call.1} parent=1 // pred_check_branch
      %24 = sbr.rel (0) target = $region9
    $region8: #{tpu_custom_call.1} parent=1 // pred_region
      _
    $region9: #{tpu_custom_call.1} parent=1 // pred_fallthru
      _
    // Predicated region
    $region10: #{tpu_custom_call.1} parent=1 // pred_check
      _
    $region11: #{tpu_custom_call.1} parent=1 // pred_check_branch
      %26 = sbr.rel (0) target = $region13
    $region12: #{tpu_custom_call.1} parent=1 // pred_region
      %s28 = ssub.s32 256, 256
      %29 = vsyncadd [#allocation7], %s28
      %s30 = sshll.u32 [#allocation6], 4
      %s31 = int_to_ptr.vmem [resolvable:$true] %s30
      %36 = dma.hbm_to_vmem [thread:$0]  %s2, 256, %s31, [#allocation7], 64, 64, 4
    $region13: #{tpu_custom_call.1} parent=1 // pred_fallthru
      _
    // Predicated region
    $region14: #{tpu_custom_call.1} parent=1 // pred_check
      _
    $region15: #{tpu_custom_call.1} parent=1 // pred_check_branch
      %38 = sbr.rel (0) target = $region17
    $region16: #{tpu_custom_call.1} parent=1 // pred_region
      %39 = dma.done [#allocation4], 128
    $region17: #{tpu_custom_call.1} parent=1 // pred_fallthru
      _
    // Predicated region
    $region18: #{tpu_custom_call.1} parent=1 // pred_check
      _
    $region19: #{tpu_custom_call.1} parent=1 // pred_check_branch
      %41 = sbr.rel (0) target = $region21
    $region20: #{tpu_custom_call.1} parent=1 // pred_region
      %42 = dma.done [#allocation7], 256
    $region21: #{tpu_custom_call.1} parent=1 // pred_fallthru
      _
    %p44 = scmp.eq.s32.totalorder 0, 0
    // Predicated region
    $region22: #{tpu_custom_call.1} parent=1 // pred_check
      %p45 = pneg %p44
    $region23: #{tpu_custom_call.1} parent=1 // pred_check_branch
      %47 = sbr.rel (%p45) target = $region25
    $region24: #{tpu_custom_call.1} parent=1 // pred_region
      %v48 = vld [vmem:[#allocation3] sm:$0xf]
      %v49 = vld [vmem:[#allocation3 + $0x4] sm:$0xf]
      %v50 = vunpack.c.l.bf16 %v48
      %v51 = vunpack.c.l.bf16 %v49
      %v52 = vmul.f32 %v50, %v50
      %v53 = vmul.f32 %v51, %v51
      %vm54 = vcmask 261120
      %v55 = vsel %vm54, %v52, 0.0
      %56 = vadd.xlane.f32.xlu0 %v55
      %v57 = vpop.xlane.xlu0 %56
      %v58 = vsel %vm54, %v53, 0.0
      %59 = vadd.xlane.f32.xlu0 %v58
      %v60 = vpop.xlane.xlu0 %59
      %v61 = vrcp.pop 32.0
      %v62 = vmul.f32 %v57, %v61
      %v63 = vmul.f32 %v60, %v61
      %v64 = vadd.f32 %v62, 1e-05
      %v65 = vadd.f32 %v63, 1e-05
      %v66 = vrsqrt.pop %v64
      %v67 = vrsqrt.pop %v65
      %v68 = vmul.f32 %v50, %v66
      %v69 = vmul.f32 %v51, %v67
      %v70 = vld [vmem:[%s1] sm:$0x1]
      %v71 = vunpack.c.l.bf16 %v70
      %v72 = vlaneseq
      %v73 = vshrl.u32 %v72, 7
      %v74 = vsub.s32 0, %v73
      %v75 = vrot.slane %v71, %v74
      %v76 = vmul.f32 %v68, %v75
      %v77 = vmul.f32 %v69, %v75
      %v78 = vpack.c.bf16 %v77, %v76
      %79 = vst.msk [vmem:[#allocation2] sm:$0xff] %vm54, %v78
    $region25: #{tpu_custom_call.1} parent=1 // pred_fallthru
      _
    %v80 = vld [vmem:[#allocation2] sm:$0xff]
    %v81 = vld [vmem:[#allocation6] sm:$0xf]
    %v82 = vld [vmem:[#allocation6 + $0x4] sm:$0xf]
    %v83 = vld [vmem:[#allocation6 + $0x8] sm:$0xf]
    %v84 = vld [vmem:[#allocation6 + $0xc] sm:$0xf]
    %v89 = vunpack.c.l.b16 %v81
    %v90 = vunpack.c.l.b16 %v82
    %v91 = vunpack.c.l.b16 %v83
    %v92 = vunpack.c.l.b16 %v84
    %v93 = vpack.c.b16 %v90, %v89
    %v94 = vpack.c.b16 %v92, %v91
    %vm97 = vcmask 261120
    %v99 = vsel %vm97, %v80, 0
    %101 = vmatprep.subr.bf16.mxu0 0
    %102 = vmatpush1.bf16.msra.mxu0 %v93
    %103 = vmatprep.subr.bf16.mxu0 0
    %104 = vmatpush1.bf16.msra.mxu0 %v94
    %105 = vmatprep.subr.bf16.mxu0 0
    %106 = vmatpush1.bf16.msra.mxu0 0
    %107 = vmatprep.subr.bf16.mxu0 0
    %108 = vmatpush1.bf16.msra.mxu0 0
    %109 = vmatprep.subr.bf16.mxu0 0
    %110 = vmatpush1.bf16.msra.mxu0 0
    %111 = vmatprep.subr.bf16.mxu0 0
    %112 = vmatpush1.bf16.msra.mxu0 0
    %113 = vmatprep.subr.bf16.mxu0 0
    %114 = vmatpush1.bf16.msra.mxu0 0
    %115 = vmatprep.subr.bf16.mxu0 0
    %116 = vmatpush1.bf16.msra.mxu0 0
    %117 = vmatprep.subr.bf16.mxu0 0
    %118 = vmatpush1.bf16.msra.mxu0 0
    %119 = vmatprep.subr.bf16.mxu0 0
    %120 = vmatpush1.bf16.msra.mxu0 0
    %121 = vmatprep.subr.bf16.mxu0 0
    %122 = vmatpush1.bf16.msra.mxu0 0
    %123 = vmatprep.subr.bf16.mxu0 0
    %124 = vmatpush1.bf16.msra.mxu0 0
    %125 = vmatprep.subr.bf16.mxu0 0
    %126 = vmatpush1.bf16.msra.mxu0 0
    %127 = vmatprep.subr.bf16.mxu0 0
    %128 = vmatpush1.bf16.msra.mxu0 0
    %129 = vmatprep.subr.bf16.mxu0 0
    %130 = vmatpush1.bf16.msra.mxu0 0
    %131 = vmatprep.subr.bf16.mxu0 0
    %132 = vmatpush1.bf16.msra.mxu0 0
    %133 = vmatprep.mubr.bf16.mxu0 0
    %134 = vmatmul.mubr.bf16.gmra.mrb[0].mxu0 %v99
    %v135 = vpop.f32.mrb[0].mxu0
    %v136 = vadd.f32 0.0, %v135
    %v137 = vpop.f32.mrb[0].mxu0
    %v138 = vpop.f32.mrb[0].mxu0
    %v139 = vadd.f32 0.0, %v138
    %v140 = vpop.f32.mrb[0].mxu0
    %141 = vdwg.mxu0
    %v142 = vpack.c.bf16 %v139, %v136
    %v144 = vunpack.c.l.b16 %v142
    %v145 = vunpack.c.h.b16 %v142
    %v146 = vpack.c.b16 %v144, %v144
    %v147 = vpack.c.b16 %v145, %v145
    %vm150 = vcmask 519168
    %151 = vst.msk [vmem:[#allocation8] sm:$0xf] %vm150, %v146
    %152 = vst.msk [vmem:[#allocation8 + $0x4] sm:$0xf] %vm150, %v147
    // Predicated region
    $region26: #{tpu_custom_call.1} parent=1 // pred_check
      _
    $region27: #{tpu_custom_call.1} parent=1 // pred_check_branch
      %154 = sbr.rel (0) target = $region29
    $region28: #{tpu_custom_call.1} parent=1 // pred_region
      %s156 = ssub.s32 128, 128
      %157 = vsyncadd [#allocation5], %s156
      %s158 = sshll.u32 [#allocation8], 4
      %s159 = int_to_ptr.vmem [resolvable:$true] %s158
      %164 = dma.vmem_to_hbm [thread:$0]  %s159, 128, %s3, [#allocation5], 64, 64, 4
    $region29: #{tpu_custom_call.1} parent=1 // pred_fallthru
      _
    // Predicated region
    $region30: #{tpu_custom_call.1} parent=1 // pred_check
      _
    $region31: #{tpu_custom_call.1} parent=1 // pred_check_branch
      %166 = sbr.rel (0) target = $region33
    $region32: #{tpu_custom_call.1} parent=1 // pred_region
      %167 = dma.done [#allocation5], 128
    $region33: #{tpu_custom_call.1} parent=1 // pred_fallthru
      _
    %168 = vsyncpa [#allocation4], 1
    %169 = vsyncpa [#allocation7], 1
    %170 = vsyncpa [#allocation5], 1

</llo_original>
